<compile_context>
chip_gen: v5e
topology: v5e:2x2
jax: 0.10.0
libtpu: 0.0.40
codegen_flags: <defaults>
</compile_context>

<pallas_src>
import functools

import jax
import jax.numpy as jnp
from jax import lax
from jax.experimental import pallas as pl
from jax.experimental.pallas import tpu as pltpu

CellPos = ("none", "identity", "cweight", "dil_conv", "dep_conv", "conv")


# ----------------------------- Pallas kernels -----------------------------

def _tap_conv_kernel(scale_ref, x_ref, w_ref, o_ref, *, H, W, C, d):
    """ReLU -> 3x3 conv (dilation d) as a single wide-K matmul.

    x_ref : (1, H, W, C) f32  unpadded input tile (one batch element)
    w_ref : (9*C, C)     bf16 dense weights, rows ordered tap-major / cin-minor
    o_ref : (1, H, W*C)  f32  lane-dense output slab
    scale_ref : (1, 1)   f32  SMEM -- architecture weight weight_normal[pos]
    """
    xr = jnp.maximum(x_ref[0], 0.0)                           # ReLU in f32 (VPU)
    # Build the zero halo in VMEM (no wrapper-side jnp.pad / extra HBM traffic).
    zrow = jnp.zeros((d, W, C), xr.dtype)
    xp = jnp.concatenate([zrow, xr, zrow], axis=0)            # (H+2d, W, C)
    zcol = jnp.zeros((H + 2 * d, d, C), xr.dtype)
    xp = jnp.concatenate([zcol, xp, zcol], axis=1)            # (H+2d, W+2d, C)
    # im2col strip: one (H*W, 9C) operand instead of 9 tiny K=C matmuls.
    taps = [xp[dy:dy + H, dx:dx + W, :]
            for dy in (0, d, 2 * d) for dx in (0, d, 2 * d)]
    patches = jnp.concatenate(taps, axis=-1)                  # (H, W, 9C)
    patches = patches.reshape(H * W, 9 * C).astype(jnp.bfloat16)
    acc = jnp.dot(patches, w_ref[...],
                  preferred_element_type=jnp.float32)         # (H*W, C), f32 acc
    out = scale_ref[0, 0] * acc.reshape(H, W * C)             # lane-dense epilogue
    o_ref[0] = out.astype(o_ref.dtype)


def _scale_kernel(scale_ref, x_ref, o_ref):
    """identity primitive: out = weight * x (single lane-dense block)."""
    o_ref[...] = (scale_ref[0, 0] * x_ref[...]).astype(o_ref.dtype)


def _cweight_kernel(scale_ref, x_ref, w1_ref, w2_ref, o_ref, *, H, W, C):
    """SE-style channel weighting: out = weight * (x * sigmoid(fc2(relu(fc1(GAP(x))))))."""
    xf = x_ref[0].reshape(H * W, C)                                     # (HW, C)
    gap = jnp.mean(xf, axis=0, keepdims=True)                           # (1, C)
    h = jnp.maximum(jnp.dot(gap, w1_ref[...],
                            preferred_element_type=jnp.float32), 0.0)   # (1, Cr)
    z = jnp.dot(h, w2_ref[...], preferred_element_type=jnp.float32)     # (1, C)
    s = pl.reciprocal(1.0 + jnp.exp(-z), approx=True)                   # sigmoid (EUP)
    gated = xf * s                                                      # (HW, C)
    out = scale_ref[0, 0] * gated.reshape(H, W * C)                     # lane-dense
    o_ref[0] = out.astype(o_ref.dtype)


# ----------------------------- pallas_call wrappers -----------------------------

def _run_tap_conv(x, w_flat, scale, dilation):
    N, H, W, C = x.shape
    d = int(dilation)
    kernel = functools.partial(_tap_conv_kernel, H=H, W=W, C=C, d=d)
    out = pl.pallas_call(
        kernel,
        out_shape=jax.ShapeDtypeStruct((N, H, W * C), jnp.float32),
        grid=(N,),
        in_specs=[
            pl.BlockSpec(memory_space=pltpu.MemorySpace.SMEM),        # scale (1,1)
            pl.BlockSpec((1, H, W, C), lambda n: (n, 0, 0, 0)),       # x (one image)
            pl.BlockSpec((9 * C, C), lambda n: (0, 0)),               # bf16 weights (resident)
        ],
        out_specs=pl.BlockSpec((1, H, W * C), lambda n: (n, 0, 0)),   # lane-dense slab
        compiler_params=pltpu.CompilerParams(
            dimension_semantics=("parallel",),                        # batch across TCs (v7x)
            vmem_limit_bytes=32 * 1024 * 1024),
    )(scale, x, w_flat)
    return out.reshape(N, H, W, C)


def _run_scale(x, scale):
    N, H, W, C = x.shape
    x2 = x.reshape(N, H, W * C)                                       # lane-dense view
    out = pl.pallas_call(
        _scale_kernel,
        out_shape=jax.ShapeDtypeStruct((N, H, W * C), jnp.float32),
        in_specs=[
            pl.BlockSpec(memory_space=pltpu.MemorySpace.SMEM),
            pl.BlockSpec(memory_space=pltpu.MemorySpace.VMEM),
        ],
        out_specs=pl.BlockSpec(memory_space=pltpu.MemorySpace.VMEM),
    )(scale, x2)
    return out.reshape(N, H, W, C)


def _run_cweight(x, w1, w2, scale):
    N, H, W, C = x.shape
    Cr = w1.shape[1]
    kernel = functools.partial(_cweight_kernel, H=H, W=W, C=C)
    out = pl.pallas_call(
        kernel,
        out_shape=jax.ShapeDtypeStruct((N, H, W * C), jnp.float32),
        grid=(N,),
        in_specs=[
            pl.BlockSpec(memory_space=pltpu.MemorySpace.SMEM),
            pl.BlockSpec((1, H, W, C), lambda n: (n, 0, 0, 0)),
            pl.BlockSpec((C, Cr), lambda n: (0, 0)),
            pl.BlockSpec((Cr, C), lambda n: (0, 0)),
        ],
        out_specs=pl.BlockSpec((1, H, W * C), lambda n: (n, 0, 0)),
        compiler_params=pltpu.CompilerParams(dimension_semantics=("parallel",)),
    )(scale, x, w1, w2)
    return out.reshape(N, H, W, C)


# ----------------------------- MixedOp (JAX) -----------------------------

class MixedOp:
    def __init__(self, c, stride, mixop_type, switch, dp, key):
        if mixop_type != "normal":
            # TODO(synk): 'down'/'up' primitives (strided pool / transposed conv) not implemented.
            raise NotImplementedError("only mixop_type='normal' is implemented")
        assert stride == 1 and len(CellPos) == len(switch), "the mixop type or nums is wrong"
        self._op_type = mixop_type
        self._dp = dp  # dropout: no-op in eval mode
        self._ops = []
        keys = jax.random.split(key, len(switch))
        for i, on in enumerate(switch):
            if on:
                prim = CellPos[i]
                self._ops.append((prim, self._init_op(prim, c, keys[i])))

    @staticmethod
    def _init_op(prim, c, key):
        if prim in ("none", "identity"):
            return {}
        if prim == "conv":
            w = jax.random.normal(key, (9, c, c), jnp.float32) / (3.0 * jnp.sqrt(float(c)))
            return {"w_taps": w,
                    "w_flat": w.reshape(9 * c, c).astype(jnp.bfloat16),
                    "dilation": 1}
        if prim in ("dep_conv", "dil_conv"):
            k1, k2 = jax.random.split(key)
            dw = jax.random.normal(k1, (9, c), jnp.float32) / 3.0                 # depthwise 3x3
            pw = jax.random.normal(k2, (c, c), jnp.float32) / jnp.sqrt(float(c))  # pointwise 1x1
            # fold depthwise + pointwise into one dense weight per tap:
            # W_t[cin, cout] = dw[t, cin] * pw[cin, cout]
            w_taps = dw[:, :, None] * pw[None, :, :]
            return {"w_taps": w_taps,
                    "w_flat": w_taps.reshape(9 * c, c).astype(jnp.bfloat16),
                    "dilation": 1 if prim == "dep_conv" else 2}
        if prim == "cweight":
            cr = max(c // 2, 4)
            k1, k2 = jax.random.split(key)
            w1 = jax.random.normal(k1, (c, cr), jnp.float32) / jnp.sqrt(float(c))
            w2 = jax.random.normal(k2, (cr, c), jnp.float32) / jnp.sqrt(float(cr))
            return {"w1": w1, "w2": w2}
        raise ValueError(prim)

    def forward(self, x, weight_normal, weight_down, weight_up,
                pos_normal, pos_up, pos_down):
        # 'normal' branch: rst = weight_normal[pos_normal] * self._ops[pos_normal](x)
        prim, params = self._ops[pos_normal]
        scale = weight_normal[pos_normal].reshape(1, 1).astype(jnp.float32)
        if prim == "none":
            return jnp.zeros_like(x)                      # Zero op -> weight * 0
        if prim == "identity":
            return _run_scale(x, scale)
        if prim == "cweight":
            return _run_cweight(x, params["w1"], params["w2"], scale)
        return _run_tap_conv(x, params["w_flat"], scale, params["dilation"])


# ----------------------------- demo / check -----------------------------

if __name__ == "__main__":
    key = jax.random.PRNGKey(0)
    k_x, k_p = jax.random.split(key)

    N, C, H, W = 2, 8, 16, 16
    x_nchw = jax.random.normal(k_x, (N, C, H, W), jnp.float32)   # PyTorch layout
    x = jnp.transpose(x_nchw, (0, 2, 3, 1))                      # -> NHWC

    switch = [True] * len(CellPos)
    mixed = MixedOp(c=C, stride=1, mixop_type="normal", switch=switch, dp=0.0, key=k_p)

    weight_normal = jnp.linspace(0.1, 0.7, len(CellPos)).astype(jnp.float32)
    weight_down = jnp.zeros((6,), jnp.float32)
    weight_up = jnp.zeros((4,), jnp.float32)

    # run every enabled primitive once
    outs = []
    for pos in range(len(CellPos)):
        out = mixed.forward(x, weight_normal, weight_down, weight_up,
                            pos_normal=pos, pos_up=0, pos_down=0)
        out = jax.block_until_ready(out)
        assert out.shape == (N, H, W, C) and out.dtype == jnp.float32
        outs.append(out)

    # 'none' -> zeros ; 'identity' -> weight * x
    assert jnp.allclose(outs[CellPos.index("none")], 0.0)
    p_id = CellPos.index("identity")
    assert jnp.allclose(outs[p_id], weight_normal[p_id] * x, atol=1e-6)

    # conv / dil_conv checked against lax.conv_general_dilated (bf16 operands, f32 acc)
    def ref_conv(pos, dilation):
        w_taps = mixed._ops[pos][1]["w_taps"]                         # (9, C, C) f32
        w_hwio = w_taps.astype(jnp.bfloat16).reshape(3, 3, C, C)      # HWIO, bf16
        pad = dilation
        r = lax.conv_general_dilated(
            jnp.maximum(x, 0.0).astype(jnp.bfloat16), w_hwio,
            window_strides=(1, 1), padding=((pad, pad), (pad, pad)),
            rhs_dilation=(dilation, dilation),
            dimension_numbers=("NHWC", "HWIO", "NHWC"),
            preferred_element_type=jnp.float32)
        return weight_normal[pos] * r

    p_conv = CellPos.index("conv")
    assert jnp.allclose(outs[p_conv], ref_conv(p_conv, 1), atol=5e-3, rtol=5e-3)
    p_dil = CellPos.index("dil_conv")
    assert jnp.allclose(outs[p_dil], ref_conv(p_dil, 2), atol=5e-3, rtol=5e-3)

    print("KERNEL_OK")
</pallas_src>

<mosaic_0001>
module attributes {stable_mosaic.version = 11 : i64} {
  func.func @_scale_kernel(%arg0: memref<1x1xf32, #tpu.memory_space<smem>>, %arg1: memref<2x16x128xf32, #tpu.memory_space<vmem>>, %arg2: memref<2x16x128xf32, #tpu.memory_space<vmem>>) attributes {dimension_semantics = [], scalar_prefetch = 0 : i64, scratch_operands = 0 : i64, tpu.core_type = #tpu.core_type<tc>} {
    %c0 = arith.constant 0 : index
    %c0_0 = arith.constant 0 : index
    %0 = memref.load %arg0[%c0, %c0_0] : memref<1x1xf32, #tpu.memory_space<smem>>
    %c0_1 = arith.constant 0 : index
    %c0_2 = arith.constant 0 : index
    %c0_3 = arith.constant 0 : index
    %1 = vector.load %arg1[%c0_1, %c0_2, %c0_3] : memref<2x16x128xf32, #tpu.memory_space<vmem>>, vector<2x16x128xf32>
    %2 = vector.broadcast %0 : f32 to vector<2x16x128xf32>
    %3 = arith.mulf %2, %1 : vector<2x16x128xf32>
    %c0_4 = arith.constant 0 : index
    %c0_5 = arith.constant 0 : index
    %c0_6 = arith.constant 0 : index
    %4 = vector.load %arg2[%c0_4, %c0_5, %c0_6] : memref<2x16x128xf32, #tpu.memory_space<vmem>>, vector<2x16x128xf32>
    tpu.vector_store %arg2[%c0_4, %c0_5, %c0_6], %3 {strides = array<i32>} : memref<2x16x128xf32, #tpu.memory_space<vmem>>, vector<2x16x128xf32>,
    return
  }
}

</mosaic_0001>

<llo_original>
// kernel: tpu_custom_call.1
$region0: #{tpu_custom_call.1}
  #allocation0 [shape = 'u32[]', space=smem, size = 0x4, offset = 0x4, fixed_abs, tag = 'smem constant byte address 0x4 - core index']
  #allocation1 [shape = 'u32[72,128]{1,0:T(1,128)}', space=vmem, size = 0x9000, scoped, tag = 'internal scratch']
  #allocation2 [shape = 'f32[1,1]{1,0:T(1,128)S(6)}', space=smem, size = 0x200, scoped, tag = 'scoped memory for tpu_custom_call.1']
  %s0 = inlined_call_operand.<no memory space> [shape: f32[1,1], index: 0, kind: input, shape index: {}]
  %s1 = inlined_call_operand.hbm [shape: f32[2,16,128], index: 1, kind: input, shape index: {}]
  %s2 = inlined_call_operand.hbm [shape: f32[2,16,128], index: 2, kind: output, shape index: {}]
  %s3 = sld [smem:[#allocation0]]
  $region22: #{tpu_custom_call.1} parent=0
    _
  %s5 = ssub.s32 1, %s3
  %s6 = scalar_select 0, %s5, %s3
  %7 = sst [smem:[#allocation2]] %s0
  $region1: #{tpu_custom_call.1} parent=0
    #allocation3 [shape = 'u8[16384]{0}', space=vmem, size = 0x4000, scoped, tag = 'input window, operand 1, single buffered']
    #allocation4 [shape = 's32[1]{0}', space=sflag, size = 0x4, scoped, tag = 'scoped memory for tpu_custom_call.1']
    #allocation5 [shape = 's32[1]{0}', space=sflag, size = 0x4, scoped, tag = 'scoped memory for tpu_custom_call.1']
    #allocation6 [shape = 'u8[16384]{0}', space=vmem, size = 0x4000, scoped, tag = 'output window, operand 0, single buffered']
    %8 = vsyncpa [#allocation4], 0
    %9 = vsyncpa [#allocation5], 0
    // Predicated region
    $region2: #{tpu_custom_call.1} parent=1 // pred_check
      _
    $region3: #{tpu_custom_call.1} parent=1 // pred_check_branch
      %11 = sbr.rel (0) target = $region5
    $region4: #{tpu_custom_call.1} parent=1 // pred_region
      _
    $region5: #{tpu_custom_call.1} parent=1 // pred_fallthru
      _
    // Predicated region
    $region6: #{tpu_custom_call.1} parent=1 // pred_check
      _
    $region7: #{tpu_custom_call.1} parent=1 // pred_check_branch
      %13 = sbr.rel (0) target = $region9
    $region8: #{tpu_custom_call.1} parent=1 // pred_region
      %15 = vsyncadd [#allocation4], 0
      %s16 = sshll.u32 %s1, 4
      %s17 = int_to_ptr.hbm [resolvable:$true] %s16
      %s18 = sshll.u32 [#allocation3], 4
      %s19 = int_to_ptr.vmem [resolvable:$true] %s18
      %24 = dma.hbm_to_vmem [thread:$0]  %s17, 512, %s19, [#allocation4], 128, 128, 8
    $region9: #{tpu_custom_call.1} parent=1 // pred_fallthru
      _
    // Predicated region
    $region10: #{tpu_custom_call.1} parent=1 // pred_check
      _
    $region11: #{tpu_custom_call.1} parent=1 // pred_check_branch
      %26 = sbr.rel (0) target = $region13
    $region12: #{tpu_custom_call.1} parent=1 // pred_region
      %28 = dma.done [#allocation4], 512
    $region13: #{tpu_custom_call.1} parent=1 // pred_fallthru
      _
    %s29 = sld [smem:[#allocation2]]
    %v30 = vld [vmem:[#allocation3] sm:$0xff]
    %v31 = vld [vmem:[#allocation3 + $0x8] sm:$0xff]
    %v32 = vld [vmem:[#allocation3 + $0x10] sm:$0xff]
    %v33 = vld [vmem:[#allocation3 + $0x18] sm:$0xff]
    %v34 = vstv %s29
    %v35 = vmul.f32 %v34, %v30
    %v36 = vmul.f32 %v34, %v31
    %v37 = vmul.f32 %v34, %v32
    %v38 = vmul.f32 %v34, %v33
    %39 = vst [vmem:[#allocation6] sm:$0xff] %v35
    %40 = vst [vmem:[#allocation6 + $0x8] sm:$0xff] %v36
    %41 = vst [vmem:[#allocation6 + $0x10] sm:$0xff] %v37
    %42 = vst [vmem:[#allocation6 + $0x18] sm:$0xff] %v38
    // Predicated region
    $region14: #{tpu_custom_call.1} parent=1 // pred_check
      _
    $region15: #{tpu_custom_call.1} parent=1 // pred_check_branch
      %44 = sbr.rel (0) target = $region17
    $region16: #{tpu_custom_call.1} parent=1 // pred_region
      %46 = vsyncadd [#allocation5], 0
      %s47 = sshll.u32 [#allocation6], 4
      %s48 = int_to_ptr.vmem [resolvable:$true] %s47
      %s49 = sshll.u32 %s2, 4
      %s50 = int_to_ptr.hbm [resolvable:$true] %s49
      %55 = dma.vmem_to_hbm [thread:$0]  %s48, 512, %s50, [#allocation5], 128, 128, 8
    $region17: #{tpu_custom_call.1} parent=1 // pred_fallthru
      _
    // Predicated region
    $region18: #{tpu_custom_call.1} parent=1 // pred_check
      _
    $region19: #{tpu_custom_call.1} parent=1 // pred_check_branch
      %57 = sbr.rel (0) target = $region21
    $region20: #{tpu_custom_call.1} parent=1 // pred_region
      %59 = dma.done [#allocation5], 512
    $region21: #{tpu_custom_call.1} parent=1 // pred_fallthru
      _
    %60 = vsyncpa [#allocation4], 1
    %61 = vsyncpa [#allocation5], 1

</llo_original>
